<compile_context>
chip_gen: v7x
topology: tpu7x:2x2x1
jax: 0.10.0
libtpu: 0.0.40
codegen_flags: <defaults>
</compile_context>

<pallas_src>
import functools

import jax
import jax.numpy as jnp
from jax.experimental import pallas as pl
from jax.experimental.pallas import tpu as pltpu

EPS = 1e-5


def dueling_q_kernel(
    x_ref,        # (B, S_pad)            input (possibly bf16), state dim 8-padded
    wt_ref,       # (S_pad + 2L, L)       fused trunk weights [w0; w1; w2]
    ws_ref,       # (L, 2L)               fused value|advantage hidden weight
    wh_ref,       # (2L, L)               block-diag head: cols 0..A-1 adv, col A value,
                  #                       col A+1 = advantage row-mean, rest zero
    gbt_ref,      # (7, L)  f32           rows 0..5: g0,be0,g1,be1,g2,be2; row 6: head bias
    gbs_ref,      # (2, 2L) f32           [gamma_v|gamma_a, beta_v|beta_a]
    out_ref,      # (B, L)  f32           lane-dense output slab
    *,
    action_size,
):
    f32 = jnp.float32
    batch = x_ref.shape[0]
    s_pad = x_ref.shape[1]
    L = wt_ref.shape[1]
    A = action_size
    inv_b = 1.0 / batch

    def mm(a, w):
        # cast LHS to weight dtype so bf16 weights hit the native bf16 MXU path,
        # always accumulate in f32.  (astype is a no-op when dtypes already match.)
        return jnp.dot(a.astype(w.dtype), w, preferred_element_type=f32)

    def bn_relu(h, gamma, beta):
        # BatchNorm1d, training mode, biased variance -- single pass over h.
        # scale/shift algebra stays on the (1,F) row; the (B,F) tile sees only
        # one multiply + one add (+ ReLU).
        mean = jnp.sum(h, axis=0, keepdims=True) * inv_b
        ex2 = jnp.sum(h * h, axis=0, keepdims=True) * inv_b
        var = jnp.maximum(ex2 - mean * mean, 0.0)
        scale = gamma * jax.lax.rsqrt(var + EPS)        # (1, F)
        shift = beta - mean * scale                     # (1, F)
        return jnp.maximum(h * scale + shift, 0.0)

    x = x_ref[...]

    # ---- shared trunk (3 layers); static 8-aligned row slices of the fused weight ----
    h = bn_relu(mm(x, wt_ref[0:s_pad, :]), gbt_ref[0:1, :], gbt_ref[1:2, :])
    h = bn_relu(mm(h, wt_ref[s_pad:s_pad + L, :]), gbt_ref[2:3, :], gbt_ref[3:4, :])
    h = bn_relu(mm(h, wt_ref[s_pad + L:s_pad + 2 * L, :]), gbt_ref[4:5, :], gbt_ref[5:6, :])

    # ---- fused value|advantage hidden: (B,L)@(L,2L), one BN/ReLU over 2L features ----
    s = bn_relu(mm(h, ws_ref[...]), gbs_ref[0:1, :], gbs_ref[1:2, :])

    # ---- fused head: (B,2L)@(2L,L) + bias row ----
    head = mm(s, wh_ref[...]) + gbt_ref[6:7, :]

    # cols 0..A-1 = advantage, col A = value, col A+1 = per-row advantage mean.
    value = head[:, A:A + 1]                                   # (B, 1)
    adv_mean = jnp.sum(head[:, A + 1:A + 2]) * inv_b           # global advantage mean

    # dueling combine; lane-dense full-width store, wrapper keeps cols [0, A).
    out_ref[...] = value + head - adv_mean


def dueling_q_forward(x, packed, action_size):
    """x: (B, state_size) float32.  packed: output of pack_params()."""
    w_trunk, w_stream, w_head, gbt_bh, gbs = packed
    B = x.shape[0]
    L = w_stream.shape[0]
    s_pad = w_trunk.shape[0] - 2 * L
    head_pad = w_head.shape[1]
    w_dtype = w_trunk.dtype

    xc = x.astype(w_dtype)
    if xc.shape[1] != s_pad:
        xc = jnp.pad(xc, ((0, 0), (0, s_pad - xc.shape[1])))

    args = (xc, w_trunk, w_stream, w_head, gbt_bh, gbs)

    bytes_accessed = sum(int(a.size) * a.dtype.itemsize for a in args)
    bytes_accessed += B * head_pad * 4
    flops = 2 * B * (s_pad * L + 2 * L * L + L * 2 * L + 2 * L * head_pad)
    transcendentals = 3 * L + 2 * L  # one rsqrt per BN feature

    vmem = pl.BlockSpec(memory_space=pltpu.MemorySpace.VMEM)
    out = pl.pallas_call(
        functools.partial(dueling_q_kernel, action_size=action_size),
        out_shape=jax.ShapeDtypeStruct((B, head_pad), jnp.float32),
        in_specs=[vmem] * len(args),
        out_specs=vmem,
        cost_estimate=pl.CostEstimate(
            flops=int(flops),
            transcendentals=int(transcendentals),
            bytes_accessed=int(bytes_accessed),
        ),
    )(*args)
    return out[:, :action_size]


# ----------------------------- parameter handling -----------------------------

def _linear_params(key, fan_in, fan_out):
    # PyTorch nn.Linear default init: U(-1/sqrt(fan_in), 1/sqrt(fan_in)).
    kw, kb = jax.random.split(key)
    bound = 1.0 / jnp.sqrt(jnp.float32(fan_in))
    w = jax.random.uniform(kw, (fan_in, fan_out), jnp.float32, -bound, bound)
    b = jax.random.uniform(kb, (1, fan_out), jnp.float32, -bound, bound)
    return w, b


def make_params(key, state_size, action_size, layer_size=128, num_layers=3):
    """Full PyTorch-equivalent parameter list (all biases kept, for the reference)."""
    params = []
    keys = jax.random.split(key, num_layers + 4)
    in_size = state_size
    for i in range(num_layers):
        w, b = _linear_params(keys[i], in_size, layer_size)
        params += [w, b,
                   jnp.ones((1, layer_size), jnp.float32),
                   jnp.zeros((1, layer_size), jnp.float32)]
        in_size = layer_size
    wv1, bv1 = _linear_params(keys[num_layers + 0], layer_size, layer_size)
    wv2, bv2 = _linear_params(keys[num_layers + 1], layer_size, 1)
    params += [wv1, bv1, jnp.ones((1, layer_size), jnp.float32),
               jnp.zeros((1, layer_size), jnp.float32), wv2, bv2]
    wa1, ba1 = _linear_params(keys[num_layers + 2], layer_size, layer_size)
    wa2, ba2 = _linear_params(keys[num_layers + 3], layer_size, action_size)
    params += [wa1, ba1, jnp.ones((1, layer_size), jnp.float32),
               jnp.zeros((1, layer_size), jnp.float32), wa2, ba2]
    return params


def pack_params(params, action_size, dtype=jnp.bfloat16):
    """Pack the 24 PyTorch-style params into 5 kernel arrays.

    Biases of Linear layers feeding training-mode BatchNorm are dropped (they cancel
    exactly in the BN mean subtraction).  Matmul weights are cast to `dtype`
    (bf16 default for the native MXU path, or f32); BN affine params and the head
    bias stay f32.  The advantage row-mean is folded into head column A+1 so the
    kernel's global-mean reduce is a single column sum.
    """
    (w0, _b0, g0, be0, w1, _b1, g1, be1, w2, _b2, g2, be2,
     wv1, _bv1, gv, bev, wv2, bv2,
     wa1, _ba1, ga, bea, wa2, ba2) = params

    S, L = w0.shape
    head_pad = L
    assert action_size + 2 <= head_pad, "need room for value + adv-mean columns"

    # Pad the state dim to a multiple of 8 sublanes so in-kernel trunk-weight row
    # slices stay tile-aligned views (no VMEM copies).
    s_pad = -(-S // 8) * 8
    w0p = jnp.zeros((s_pad, L), jnp.float32).at[:S, :].set(w0)

    w_trunk = jnp.concatenate([w0p, w1, w2], axis=0)                       # (s_pad+2L, L)
    w_stream = jnp.concatenate([wv1, wa1], axis=1)                         # (L, 2L)

    # Block-diagonal head: rows 0..L-1 = value stream, rows L..2L-1 = advantage stream.
    w_head = jnp.zeros((2 * L, head_pad), jnp.float32)
    w_head = w_head.at[:L, action_size].set(wv2[:, 0])           # value -> col A
    w_head = w_head.at[L:, :action_size].set(wa2)                # advantage -> cols 0..A-1
    w_head = w_head.at[L:, action_size + 1].set(jnp.mean(wa2, axis=1))  # row-mean -> col A+1

    b_head = jnp.zeros((1, head_pad), jnp.float32)
    b_head = b_head.at[0, :action_size].set(ba2[0])
    b_head = b_head.at[0, action_size].set(bv2[0, 0])
    b_head = b_head.at[0, action_size + 1].set(jnp.mean(ba2))

    gbt_bh = jnp.concatenate([g0, be0, g1, be1, g2, be2, b_head], axis=0)  # (7, L) f32
    gbs = jnp.concatenate(
        [jnp.concatenate([gv, ga], axis=1),
         jnp.concatenate([bev, bea], axis=1)], axis=0)                     # (2, 2L) f32

    return (w_trunk.astype(dtype), w_stream.astype(dtype), w_head.astype(dtype),
            gbt_bh, gbs)


# ----------------------------- pure-JAX reference ------------------------------

def _reference_forward(x, params):
    """Faithful f32 reference of the PyTorch module (all biases, two-pass BN)."""
    (w0, b0, g0, be0, w1, b1, g1, be1, w2, b2, g2, be2,
     wv1, bv1, gv, bev, wv2, bv2,
     wa1, ba1, ga, bea, wa2, ba2) = params

    def bn_relu(h, g, b):
        m = jnp.mean(h, axis=0, keepdims=True)
        v = jnp.mean((h - m) ** 2, axis=0, keepdims=True)
        return jnp.maximum((h - m) / jnp.sqrt(v + EPS) * g + b, 0.0)

    h = bn_relu(x @ w0 + b0, g0, be0)
    h = bn_relu(h @ w1 + b1, g1, be1)
    h = bn_relu(h @ w2 + b2, g2, be2)
    value = bn_relu(h @ wv1 + bv1, gv, bev) @ wv2 + bv2
    adv = bn_relu(h @ wa1 + ba1, ga, bea) @ wa2 + ba2
    # Module spec: advantage.mean() is a GLOBAL mean (over batch and actions).
    return value + adv - jnp.mean(adv)


if __name__ == "__main__":
    BATCH = 8          # >1 required for batch-stat BatchNorm; multiple of 8 sublanes
    STATE_SIZE = 16
    ACTION_SIZE = 4
    LAYER_SIZE = 128

    key = jax.random.PRNGKey(0)
    kx, kp = jax.random.split(key)
    x = jax.random.normal(kx, (BATCH, STATE_SIZE), jnp.float32)
    params = make_params(kp, STATE_SIZE, ACTION_SIZE, LAYER_SIZE, num_layers=3)
    ref = _reference_forward(x, params)

    # f32 path: tight check against full PyTorch-semantics reference.
    packed_f32 = pack_params(params, ACTION_SIZE, dtype=jnp.float32)
    out_f32 = jax.block_until_ready(dueling_q_forward(x, packed_f32, ACTION_SIZE))
    assert out_f32.shape == (BATCH, ACTION_SIZE), out_f32.shape
    assert jnp.allclose(out_f32, ref, atol=5e-4, rtol=5e-4), (
        f"f32 max abs err = {jnp.max(jnp.abs(out_f32 - ref))}"
    )

    # bf16 MXU fast path (default pack dtype): loose check, f32 accumulation + f32 BN math.
    packed_bf16 = pack_params(params, ACTION_SIZE, dtype=jnp.bfloat16)
    out_bf16 = jax.block_until_ready(dueling_q_forward(x, packed_bf16, ACTION_SIZE))
    assert jnp.all(jnp.isfinite(out_bf16))
    assert jnp.allclose(out_bf16, ref, atol=1e-1, rtol=1e-1), (
        f"bf16 max abs err = {jnp.max(jnp.abs(out_bf16 - ref))}"
    )

    print("KERNEL_OK")
</pallas_src>

<mosaic_0001>
module attributes {stable_mosaic.version = 11 : i64} {
  func.func @dueling_q_kernel(%arg0: memref<8x16xf32, #tpu.memory_space<vmem>>, %arg1: memref<272x128xf32, #tpu.memory_space<vmem>>, %arg2: memref<128x256xf32, #tpu.memory_space<vmem>>, %arg3: memref<256x128xf32, #tpu.memory_space<vmem>>, %arg4: memref<7x128xf32, #tpu.memory_space<vmem>>, %arg5: memref<2x256xf32, #tpu.memory_space<vmem>>, %arg6: memref<8x128xf32, #tpu.memory_space<vmem>>) attributes {dimension_semantics = [], scalar_prefetch = 0 : i64, scratch_operands = 0 : i64, tpu.core_type = #tpu.core_type<tc>} {
    %c0 = arith.constant 0 : index
    %c0_0 = arith.constant 0 : index
    %0 = vector.load %arg0[%c0, %c0_0] : memref<8x16xf32, #tpu.memory_space<vmem>>, vector<8x16xf32>
    %c0_1 = arith.constant 0 : index
    %c0_2 = arith.constant 0 : index
    %1 = vector.load %arg1[%c0_1, %c0_2] : memref<272x128xf32, #tpu.memory_space<vmem>>, vector<16x128xf32>
    %cst = arith.constant dense<0.000000e+00> : vector<8x128xf32>
    %2 = tpu.matmul %0, %1, %cst {dimension_numbers = #tpu.dot_dimension_numbers<[1], [0], [0], [1], [0, 0, 1, 1], [], []>} : vector<8x16xf32>, vector<16x128xf32>, vector<8x128xf32> -> vector<8x128xf32>
    %c0_3 = arith.constant 0 : index
    %c0_4 = arith.constant 0 : index
    %3 = vector.load %arg4[%c0_3, %c0_4] : memref<7x128xf32, #tpu.memory_space<vmem>>, vector<1x128xf32>
    %c1 = arith.constant 1 : index
    %c0_5 = arith.constant 0 : index
    %4 = vector.load %arg4[%c1, %c0_5] : memref<7x128xf32, #tpu.memory_space<vmem>>, vector<1x128xf32>
    %cst_6 = arith.constant dense<0.000000e+00> : vector<128xf32>
    %5 = vector.multi_reduction <add>, %2, %cst_6 [0] : vector<8x128xf32> to vector<128xf32>
    %6 = vector.shape_cast %5 : vector<128xf32> to vector<1x128xf32>
    %cst_7 = arith.constant 1.250000e-01 : f32
    %7 = vector.broadcast %cst_7 : f32 to vector<1x128xf32>
    %8 = arith.mulf %6, %7 : vector<1x128xf32>
    %9 = arith.mulf %2, %2 : vector<8x128xf32>
    %cst_8 = arith.constant dense<0.000000e+00> : vector<128xf32>
    %10 = vector.multi_reduction <add>, %9, %cst_8 [0] : vector<8x128xf32> to vector<128xf32>
    %11 = vector.shape_cast %10 : vector<128xf32> to vector<1x128xf32>
    %cst_9 = arith.constant 1.250000e-01 : f32
    %12 = vector.broadcast %cst_9 : f32 to vector<1x128xf32>
    %13 = arith.mulf %11, %12 : vector<1x128xf32>
    %14 = arith.mulf %8, %8 : vector<1x128xf32>
    %15 = arith.subf %13, %14 : vector<1x128xf32>
    %cst_10 = arith.constant 0.000000e+00 : f32
    %16 = vector.broadcast %cst_10 : f32 to vector<1x128xf32>
    %17 = arith.maximumf %15, %16 : vector<1x128xf32>
    %cst_11 = arith.constant 9.99999974E-6 : f32
    %18 = vector.broadcast %cst_11 : f32 to vector<1x128xf32>
    %19 = arith.addf %17, %18 : vector<1x128xf32>
    %20 = math.rsqrt %19 : vector<1x128xf32>
    %21 = arith.mulf %3, %20 : vector<1x128xf32>
    %22 = arith.mulf %8, %21 : vector<1x128xf32>
    %23 = arith.subf %4, %22 : vector<1x128xf32>
    %24 = vector.broadcast %21 : vector<1x128xf32> to vector<8x128xf32>
    %25 = arith.mulf %2, %24 : vector<8x128xf32>
    %26 = vector.broadcast %23 : vector<1x128xf32> to vector<8x128xf32>
    %27 = arith.addf %25, %26 : vector<8x128xf32>
    %cst_12 = arith.constant 0.000000e+00 : f32
    %28 = vector.broadcast %cst_12 : f32 to vector<8x128xf32>
    %29 = arith.maximumf %27, %28 : vector<8x128xf32>
    %c16 = arith.constant 16 : index
    %c0_13 = arith.constant 0 : index
    %30 = vector.load %arg1[%c16, %c0_13] : memref<272x128xf32, #tpu.memory_space<vmem>>, vector<128x128xf32>
    %cst_14 = arith.constant dense<0.000000e+00> : vector<8x128xf32>
    %31 = tpu.matmul %29, %30, %cst_14 {dimension_numbers = #tpu.dot_dimension_numbers<[1], [0], [0], [1], [0, 0, 1, 1], [], []>} : vector<8x128xf32>, vector<128x128xf32>, vector<8x128xf32> -> vector<8x128xf32>
    %c2 = arith.constant 2 : index
    %c0_15 = arith.constant 0 : index
    %32 = vector.load %arg4[%c2, %c0_15] : memref<7x128xf32, #tpu.memory_space<vmem>>, vector<1x128xf32>
    %c3 = arith.constant 3 : index
    %c0_16 = arith.constant 0 : index
    %33 = vector.load %arg4[%c3, %c0_16] : memref<7x128xf32, #tpu.memory_space<vmem>>, vector<1x128xf32>
    %cst_17 = arith.constant dense<0.000000e+00> : vector<128xf32>
    %34 = vector.multi_reduction <add>, %31, %cst_17 [0] : vector<8x128xf32> to vector<128xf32>
    %35 = vector.shape_cast %34 : vector<128xf32> to vector<1x128xf32>
    %cst_18 = arith.constant 1.250000e-01 : f32
    %36 = vector.broadcast %cst_18 : f32 to vector<1x128xf32>
    %37 = arith.mulf %35, %36 : vector<1x128xf32>
    %38 = arith.mulf %31, %31 : vector<8x128xf32>
    %cst_19 = arith.constant dense<0.000000e+00> : vector<128xf32>
    %39 = vector.multi_reduction <add>, %38, %cst_19 [0] : vector<8x128xf32> to vector<128xf32>
    %40 = vector.shape_cast %39 : vector<128xf32> to vector<1x128xf32>
    %cst_20 = arith.constant 1.250000e-01 : f32
    %41 = vector.broadcast %cst_20 : f32 to vector<1x128xf32>
    %42 = arith.mulf %40, %41 : vector<1x128xf32>
    %43 = arith.mulf %37, %37 : vector<1x128xf32>
    %44 = arith.subf %42, %43 : vector<1x128xf32>
    %cst_21 = arith.constant 0.000000e+00 : f32
    %45 = vector.broadcast %cst_21 : f32 to vector<1x128xf32>
    %46 = arith.maximumf %44, %45 : vector<1x128xf32>
    %cst_22 = arith.constant 9.99999974E-6 : f32
    %47 = vector.broadcast %cst_22 : f32 to vector<1x128xf32>
    %48 = arith.addf %46, %47 : vector<1x128xf32>
    %49 = math.rsqrt %48 : vector<1x128xf32>
    %50 = arith.mulf %32, %49 : vector<1x128xf32>
    %51 = arith.mulf %37, %50 : vector<1x128xf32>
    %52 = arith.subf %33, %51 : vector<1x128xf32>
    %53 = vector.broadcast %50 : vector<1x128xf32> to vector<8x128xf32>
    %54 = arith.mulf %31, %53 : vector<8x128xf32>
    %55 = vector.broadcast %52 : vector<1x128xf32> to vector<8x128xf32>
    %56 = arith.addf %54, %55 : vector<8x128xf32>
    %cst_23 = arith.constant 0.000000e+00 : f32
    %57 = vector.broadcast %cst_23 : f32 to vector<8x128xf32>
    %58 = arith.maximumf %56, %57 : vector<8x128xf32>
    %c144 = arith.constant 144 : index
    %c0_24 = arith.constant 0 : index
    %59 = vector.load %arg1[%c144, %c0_24] : memref<272x128xf32, #tpu.memory_space<vmem>>, vector<128x128xf32>
    %cst_25 = arith.constant dense<0.000000e+00> : vector<8x128xf32>
    %60 = tpu.matmul %58, %59, %cst_25 {dimension_numbers = #tpu.dot_dimension_numbers<[1], [0], [0], [1], [0, 0, 1, 1], [], []>} : vector<8x128xf32>, vector<128x128xf32>, vector<8x128xf32> -> vector<8x128xf32>
    %c4 = arith.constant 4 : index
    %c0_26 = arith.constant 0 : index
    %61 = vector.load %arg4[%c4, %c0_26] : memref<7x128xf32, #tpu.memory_space<vmem>>, vector<1x128xf32>
    %c5 = arith.constant 5 : index
    %c0_27 = arith.constant 0 : index
    %62 = vector.load %arg4[%c5, %c0_27] : memref<7x128xf32, #tpu.memory_space<vmem>>, vector<1x128xf32>
    %cst_28 = arith.constant dense<0.000000e+00> : vector<128xf32>
    %63 = vector.multi_reduction <add>, %60, %cst_28 [0] : vector<8x128xf32> to vector<128xf32>
    %64 = vector.shape_cast %63 : vector<128xf32> to vector<1x128xf32>
    %cst_29 = arith.constant 1.250000e-01 : f32
    %65 = vector.broadcast %cst_29 : f32 to vector<1x128xf32>
    %66 = arith.mulf %64, %65 : vector<1x128xf32>
    %67 = arith.mulf %60, %60 : vector<8x128xf32>
    %cst_30 = arith.constant dense<0.000000e+00> : vector<128xf32>
    %68 = vector.multi_reduction <add>, %67, %cst_30 [0] : vector<8x128xf32> to vector<128xf32>
    %69 = vector.shape_cast %68 : vector<128xf32> to vector<1x128xf32>
    %cst_31 = arith.constant 1.250000e-01 : f32
    %70 = vector.broadcast %cst_31 : f32 to vector<1x128xf32>
    %71 = arith.mulf %69, %70 : vector<1x128xf32>
    %72 = arith.mulf %66, %66 : vector<1x128xf32>
    %73 = arith.subf %71, %72 : vector<1x128xf32>
    %cst_32 = arith.constant 0.000000e+00 : f32
    %74 = vector.broadcast %cst_32 : f32 to vector<1x128xf32>
    %75 = arith.maximumf %73, %74 : vector<1x128xf32>
    %cst_33 = arith.constant 9.99999974E-6 : f32
    %76 = vector.broadcast %cst_33 : f32 to vector<1x128xf32>
    %77 = arith.addf %75, %76 : vector<1x128xf32>
    %78 = math.rsqrt %77 : vector<1x128xf32>
    %79 = arith.mulf %61, %78 : vector<1x128xf32>
    %80 = arith.mulf %66, %79 : vector<1x128xf32>
    %81 = arith.subf %62, %80 : vector<1x128xf32>
    %82 = vector.broadcast %79 : vector<1x128xf32> to vector<8x128xf32>
    %83 = arith.mulf %60, %82 : vector<8x128xf32>
    %84 = vector.broadcast %81 : vector<1x128xf32> to vector<8x128xf32>
    %85 = arith.addf %83, %84 : vector<8x128xf32>
    %cst_34 = arith.constant 0.000000e+00 : f32
    %86 = vector.broadcast %cst_34 : f32 to vector<8x128xf32>
    %87 = arith.maximumf %85, %86 : vector<8x128xf32>
    %c0_35 = arith.constant 0 : index
    %c0_36 = arith.constant 0 : index
    %88 = vector.load %arg2[%c0_35, %c0_36] : memref<128x256xf32, #tpu.memory_space<vmem>>, vector<128x256xf32>
    %cst_37 = arith.constant dense<0.000000e+00> : vector<8x256xf32>
    %89 = tpu.matmul %87, %88, %cst_37 {dimension_numbers = #tpu.dot_dimension_numbers<[1], [0], [0], [1], [0, 0, 1, 1], [], []>} : vector<8x128xf32>, vector<128x256xf32>, vector<8x256xf32> -> vector<8x256xf32>
    %c0_38 = arith.constant 0 : index
    %c0_39 = arith.constant 0 : index
    %90 = vector.load %arg5[%c0_38, %c0_39] : memref<2x256xf32, #tpu.memory_space<vmem>>, vector<1x256xf32>
    %c1_40 = arith.constant 1 : index
    %c0_41 = arith.constant 0 : index
    %91 = vector.load %arg5[%c1_40, %c0_41] : memref<2x256xf32, #tpu.memory_space<vmem>>, vector<1x256xf32>
    %cst_42 = arith.constant dense<0.000000e+00> : vector<256xf32>
    %92 = vector.multi_reduction <add>, %89, %cst_42 [0] : vector<8x256xf32> to vector<256xf32>
    %93 = vector.shape_cast %92 : vector<256xf32> to vector<1x256xf32>
    %cst_43 = arith.constant 1.250000e-01 : f32
    %94 = vector.broadcast %cst_43 : f32 to vector<1x256xf32>
    %95 = arith.mulf %93, %94 : vector<1x256xf32>
    %96 = arith.mulf %89, %89 : vector<8x256xf32>
    %cst_44 = arith.constant dense<0.000000e+00> : vector<256xf32>
    %97 = vector.multi_reduction <add>, %96, %cst_44 [0] : vector<8x256xf32> to vector<256xf32>
    %98 = vector.shape_cast %97 : vector<256xf32> to vector<1x256xf32>
    %cst_45 = arith.constant 1.250000e-01 : f32
    %99 = vector.broadcast %cst_45 : f32 to vector<1x256xf32>
    %100 = arith.mulf %98, %99 : vector<1x256xf32>
    %101 = arith.mulf %95, %95 : vector<1x256xf32>
    %102 = arith.subf %100, %101 : vector<1x256xf32>
    %cst_46 = arith.constant 0.000000e+00 : f32
    %103 = vector.broadcast %cst_46 : f32 to vector<1x256xf32>
    %104 = arith.maximumf %102, %103 : vector<1x256xf32>
    %cst_47 = arith.constant 9.99999974E-6 : f32
    %105 = vector.broadcast %cst_47 : f32 to vector<1x256xf32>
    %106 = arith.addf %104, %105 : vector<1x256xf32>
    %107 = math.rsqrt %106 : vector<1x256xf32>
    %108 = arith.mulf %90, %107 : vector<1x256xf32>
    %109 = arith.mulf %95, %108 : vector<1x256xf32>
    %110 = arith.subf %91, %109 : vector<1x256xf32>
    %111 = vector.broadcast %108 : vector<1x256xf32> to vector<8x256xf32>
    %112 = arith.mulf %89, %111 : vector<8x256xf32>
    %113 = vector.broadcast %110 : vector<1x256xf32> to vector<8x256xf32>
    %114 = arith.addf %112, %113 : vector<8x256xf32>
    %cst_48 = arith.constant 0.000000e+00 : f32
    %115 = vector.broadcast %cst_48 : f32 to vector<8x256xf32>
    %116 = arith.maximumf %114, %115 : vector<8x256xf32>
    %c0_49 = arith.constant 0 : index
    %c0_50 = arith.constant 0 : index
    %117 = vector.load %arg3[%c0_49, %c0_50] : memref<256x128xf32, #tpu.memory_space<vmem>>, vector<256x128xf32>
    %cst_51 = arith.constant dense<0.000000e+00> : vector<8x128xf32>
    %118 = tpu.matmul %116, %117, %cst_51 {dimension_numbers = #tpu.dot_dimension_numbers<[1], [0], [0], [1], [0, 0, 1, 1], [], []>} : vector<8x256xf32>, vector<256x128xf32>, vector<8x128xf32> -> vector<8x128xf32>
    %c6 = arith.constant 6 : index
    %c0_52 = arith.constant 0 : index
    %119 = vector.load %arg4[%c6, %c0_52] : memref<7x128xf32, #tpu.memory_space<vmem>>, vector<1x128xf32>
    %120 = vector.broadcast %119 : vector<1x128xf32> to vector<8x128xf32>
    %121 = arith.addf %118, %120 : vector<8x128xf32>
    %122 = vector.extract_strided_slice %121 {offsets = [0, 4], sizes = [8, 1], strides = [1, 1]} : vector<8x128xf32> to vector<8x1xf32>
    %123 = vector.extract_strided_slice %121 {offsets = [0, 5], sizes = [8, 1], strides = [1, 1]} : vector<8x128xf32> to vector<8x1xf32>
    %124 = vector.shape_cast %123 : vector<8x1xf32> to vector<1x8x1xf32>
    %cst_53 = arith.constant dense<0.000000e+00> : vector<1xf32>
    %125 = vector.multi_reduction <add>, %124, %cst_53 [1, 2] : vector<1x8x1xf32> to vector<1xf32>
    %126 = vector.shape_cast %125 : vector<1xf32> to vector<1x1x1xf32>
    %127 = vector.extract %126[0, 0, 0] : f32 from vector<1x1x1xf32>
    %cst_54 = arith.constant 1.250000e-01 : f32
    %128 = arith.mulf %127, %cst_54 : f32
    %129 = vector.broadcast %122 : vector<8x1xf32> to vector<8x128xf32>
    %130 = arith.addf %129, %121 : vector<8x128xf32>
    %131 = vector.broadcast %128 : f32 to vector<8x128xf32>
    %132 = arith.subf %130, %131 : vector<8x128xf32>
    %c0_55 = arith.constant 0 : index
    %c0_56 = arith.constant 0 : index
    %133 = vector.load %arg6[%c0_55, %c0_56] : memref<8x128xf32, #tpu.memory_space<vmem>>, vector<8x128xf32>
    tpu.vector_store %arg6[%c0_55, %c0_56], %132 {strides = array<i32>} : memref<8x128xf32, #tpu.memory_space<vmem>>, vector<8x128xf32>,
    return
  }
}

</mosaic_0001>

<llo_original>
// kernel: tpu_custom_call.1
$region0: #{tpu_custom_call.1}
  #allocation0 [shape = 'u32[]', space=smem, size = 0x4, offset = 0x4, fixed_abs, tag = 'smem constant byte address 0x4 - core index']
  #allocation1 [shape = 'u32[144,128]{1,0:T(1,128)}', space=vmem, size = 0x12000, scoped, tag = 'internal scratch']
  %s0 = inlined_call_operand.hbm [shape: f32[8,16], index: 0, kind: input, shape index: {}]
  %s1 = inlined_call_operand.hbm [shape: f32[272,128], index: 1, kind: input, shape index: {}]
  %s2 = inlined_call_operand.hbm [shape: f32[128,256], index: 2, kind: input, shape index: {}]
  %s3 = inlined_call_operand.hbm [shape: f32[256,128], index: 3, kind: input, shape index: {}]
  %s4 = inlined_call_operand.vmem [shape: f32[7,128], index: 4, kind: input, shape index: {}]
  %s5 = inlined_call_operand.vmem [shape: f32[2,256], index: 5, kind: input, shape index: {}]
  %s6 = inlined_call_operand.hbm [shape: f32[8,128], index: 6, kind: output, shape index: {}]
  %s7 = sld [smem:[#allocation0]]
  $region50: #{tpu_custom_call.1} parent=0
    _
  %s9 = ssub.s32 1, %s7
  %s10 = scalar_select 0, %s9, %s7
  $region1: #{tpu_custom_call.1} parent=0
    #allocation2 [shape = 'u8[4096]{0}', space=vmem, size = 0x1000, scoped, tag = 'input window, operand 0, single buffered']
    #allocation3 [shape = 's32[1]{0}', space=sflag, size = 0x4, scoped, tag = 'scoped memory for tpu_custom_call.1']
    #allocation4 [shape = 's32[1]{0}', space=sflag, size = 0x4, scoped, tag = 'scoped memory for tpu_custom_call.1']
    #allocation5 [shape = 'u8[139264]{0}', space=vmem, size = 0x22000, scoped, tag = 'input window, operand 1, single buffered']
    #allocation6 [shape = 's32[1]{0}', space=sflag, size = 0x4, scoped, tag = 'scoped memory for tpu_custom_call.1']
    #allocation7 [shape = 'u8[131072]{0}', space=vmem, size = 0x20000, scoped, tag = 'input window, operand 2, single buffered']
    #allocation8 [shape = 'u8[131072]{0}', space=vmem, size = 0x20000, scoped, tag = 'input window, operand 3, single buffered']
    #allocation9 [shape = 's32[1]{0}', space=sflag, size = 0x4, scoped, tag = 'scoped memory for tpu_custom_call.1']
    #allocation10 [shape = 'u8[4096]{0}', space=vmem, size = 0x1000, scoped, tag = 'output window, operand 0, single buffered']
    %11 = vsyncpa [#allocation3], 0
    %12 = vsyncpa [#allocation6], 0
    %13 = vsyncpa [#allocation9], 0
    %14 = vsyncpa [#allocation4], 0
    // Predicated region
    $region2: #{tpu_custom_call.1} parent=1 // pred_check
      _
    $region3: #{tpu_custom_call.1} parent=1 // pred_check_branch
      %16 = sbr.rel (0) target = $region5
    $region4: #{tpu_custom_call.1} parent=1 // pred_region
      %s18 = ssub.s32 128, 128
      %19 = vsyncadd [#allocation3], %s18
      %s21 = sshll.u32 [#allocation2], 4
      %s22 = int_to_ptr.vmem [resolvable:$true] %s21
      %24 = dma.hbm_to_vmem [thread:$0]  %s0, 128, %s22, [#allocation3]
    $region5: #{tpu_custom_call.1} parent=1 // pred_fallthru
      _
    // Predicated region
    $region6: #{tpu_custom_call.1} parent=1 // pred_check
      _
    $region7: #{tpu_custom_call.1} parent=1 // pred_check_branch
      %26 = sbr.rel (0) target = $region9
    $region8: #{tpu_custom_call.1} parent=1 // pred_region
      %s28 = ssub.s32 4352, 4352
      %29 = vsyncadd [#allocation6], %s28
      %s30 = sshll.u32 [#allocation5], 4
      %s31 = int_to_ptr.vmem [resolvable:$true] %s30
      %36 = dma.hbm_to_vmem [thread:$0]  %s1, 4352, %s31, [#allocation6], 128, 128, 8
    $region9: #{tpu_custom_call.1} parent=1 // pred_fallthru
      _
    // Predicated region
    $region10: #{tpu_custom_call.1} parent=1 // pred_check
      _
    $region11: #{tpu_custom_call.1} parent=1 // pred_check_branch
      %38 = sbr.rel (0) target = $region13
    $region12: #{tpu_custom_call.1} parent=1 // pred_region
      %s40 = ssub.s32 4096, 4096
      %41 = vsyncadd [#allocation6], %s40
      %s42 = sshll.u32 [#allocation7], 4
      %s43 = int_to_ptr.vmem [resolvable:$true] %s42
      %48 = dma.hbm_to_vmem [thread:$0]  %s2, 4096, %s43, [#allocation6], 256, 256, 16
    $region13: #{tpu_custom_call.1} parent=1 // pred_fallthru
      _
    // Predicated region
    $region14: #{tpu_custom_call.1} parent=1 // pred_check
      _
    $region15: #{tpu_custom_call.1} parent=1 // pred_check_branch
      %50 = sbr.rel (0) target = $region17
    $region16: #{tpu_custom_call.1} parent=1 // pred_region
      %s52 = ssub.s32 4096, 4096
      %53 = vsyncadd [#allocation9], %s52
      %s54 = sshll.u32 [#allocation8], 4
      %s55 = int_to_ptr.vmem [resolvable:$true] %s54
      %60 = dma.hbm_to_vmem [thread:$0]  %s3, 4096, %s55, [#allocation9], 128, 128, 8
    $region17: #{tpu_custom_call.1} parent=1 // pred_fallthru
      _
    // Predicated region
    $region18: #{tpu_custom_call.1} parent=1 // pred_check
      _
    $region19: #{tpu_custom_call.1} parent=1 // pred_check_branch
      %62 = sbr.rel (0) target = $region21
    $region20: #{tpu_custom_call.1} parent=1 // pred_region
      _
    $region21: #{tpu_custom_call.1} parent=1 // pred_fallthru
      _
    // Predicated region
    $region22: #{tpu_custom_call.1} parent=1 // pred_check
      _
    $region23: #{tpu_custom_call.1} parent=1 // pred_check_branch
      %64 = sbr.rel (0) target = $region25
    $region24: #{tpu_custom_call.1} parent=1 // pred_region
      _
    $region25: #{tpu_custom_call.1} parent=1 // pred_fallthru
      _
    // Predicated region
    $region26: #{tpu_custom_call.1} parent=1 // pred_check
      _
    $region27: #{tpu_custom_call.1} parent=1 // pred_check_branch
      %66 = sbr.rel (0) target = $region29
    $region28: #{tpu_custom_call.1} parent=1 // pred_region
      %67 = dma.done [#allocation3], 128
    $region29: #{tpu_custom_call.1} parent=1 // pred_fallthru
      _
    // Predicated region
    $region30: #{tpu_custom_call.1} parent=1 // pred_check
      _
    $region31: #{tpu_custom_call.1} parent=1 // pred_check_branch
      %69 = sbr.rel (0) target = $region33
    $region32: #{tpu_custom_call.1} parent=1 // pred_region
      %70 = dma.done [#allocation6], 4352
    $region33: #{tpu_custom_call.1} parent=1 // pred_fallthru
      _
    // Predicated region
    $region34: #{tpu_custom_call.1} parent=1 // pred_check
      _
    $region35: #{tpu_custom_call.1} parent=1 // pred_check_branch
      %72 = sbr.rel (0) target = $region37
    $region36: #{tpu_custom_call.1} parent=1 // pred_region
      %73 = dma.done [#allocation6], 4096
    $region37: #{tpu_custom_call.1} parent=1 // pred_fallthru
      _
    // Predicated region
    $region38: #{tpu_custom_call.1} parent=1 // pred_check
      _
    $region39: #{tpu_custom_call.1} parent=1 // pred_check_branch
      %75 = sbr.rel (0) target = $region41
    $region40: #{tpu_custom_call.1} parent=1 // pred_region
      %76 = dma.done [#allocation9], 4096
    $region41: #{tpu_custom_call.1} parent=1 // pred_fallthru
      _
    %v77 = vld [vmem:[#allocation2] sm:$0xff]
    %v78 = vld [vmem:[#allocation5] sm:$0xff]
    %v79 = vld [vmem:[#allocation5 + $0x8] sm:$0xff]
    %vm80 = vcmask 130048
    %v82 = vsel %vm80, %v77, 0
    %84 = vmatprep.subr.mxu0 0.0
    %85 = vmatpush1.msra.mxu0 %v78
    %86 = vmatprep.subr.mxu0 0.0
    %87 = vmatpush1.msra.mxu0 %v79
    %88 = vmatprep.subr.mxu0 0.0
    %89 = vmatpush1.msra.mxu0 0.0
    %90 = vmatprep.subr.mxu0 0.0
    %91 = vmatpush1.msra.mxu0 0.0
    %92 = vmatprep.subr.mxu0 0.0
    %93 = vmatpush1.msra.mxu0 0.0
    %94 = vmatprep.subr.mxu0 0.0
    %95 = vmatpush1.msra.mxu0 0.0
    %96 = vmatprep.subr.mxu0 0.0
    %97 = vmatpush1.msra.mxu0 0.0
    %98 = vmatprep.subr.mxu0 0.0
    %99 = vmatpush1.msra.mxu0 0.0
    %100 = vmatprep.subr.mxu0 0.0
    %101 = vmatpush1.msra.mxu0 0.0
    %102 = vmatprep.subr.mxu0 0.0
    %103 = vmatpush1.msra.mxu0 0.0
    %104 = vmatprep.subr.mxu0 0.0
    %105 = vmatpush1.msra.mxu0 0.0
    %106 = vmatprep.subr.mxu0 0.0
    %107 = vmatpush1.msra.mxu0 0.0
    %108 = vmatprep.subr.mxu0 0.0
    %109 = vmatpush1.msra.mxu0 0.0
    %110 = vmatprep.subr.mxu0 0.0
    %111 = vmatpush1.msra.mxu0 0.0
    %112 = vmatprep.subr.mxu0 0.0
    %113 = vmatpush1.msra.mxu0 0.0
    %114 = vmatprep.subr.mxu0 0.0
    %115 = vmatpush1.msra.mxu0 0.0
    %116 = vmatprep.subr.mxu0 0.0
    %117 = vmatpush1.msra.mxu0 0.0
    %118 = vmatprep.subr.mxu0 0.0
    %119 = vmatpush1.msra.mxu0 0.0
    %120 = vmatprep.subr.mxu0 0.0
    %121 = vmatpush1.msra.mxu0 0.0
    %122 = vmatprep.subr.mxu0 0.0
    %123 = vmatpush1.msra.mxu0 0.0
    %124 = vmatprep.subr.mxu0 0.0
    %125 = vmatpush1.msra.mxu0 0.0
    %126 = vmatprep.subr.mxu0 0.0
    %127 = vmatpush1.msra.mxu0 0.0
    %128 = vmatprep.subr.mxu0 0.0
    %129 = vmatpush1.msra.mxu0 0.0
    %130 = vmatprep.subr.mxu0 0.0
    %131 = vmatpush1.msra.mxu0 0.0
    %132 = vmatprep.subr.mxu0 0.0
    %133 = vmatpush1.msra.mxu0 0.0
    %134 = vmatprep.subr.mxu0 0.0
    %135 = vmatpush1.msra.mxu0 0.0
    %136 = vmatprep.subr.mxu0 0.0
    %137 = vmatpush1.msra.mxu0 0.0
    %138 = vmatprep.subr.mxu0 0.0
    %139 = vmatpush1.msra.mxu0 0.0
    %140 = vmatprep.subr.mxu0 0.0
    %141 = vmatpush1.msra.mxu0 0.0
    %142 = vmatprep.subr.mxu0 0.0
    %143 = vmatpush1.msra.mxu0 0.0
    %144 = vmatprep.subr.mxu0 0.0
    %145 = vmatpush1.msra.mxu0 0.0
    %146 = vmatprep.subr.mxu0 0.0
    %147 = vmatpush1.msra.mxu0 0.0
    %148 = vmatprep.mubr.f32.mxu0 0.0
    %149 = vmatmul.mubr.f32.gmra.mrb[0].mxu0 %v82
    %v150 = vpop.f32.mrb[0].mxu0
    %v151 = vadd.f32 0.0, %v150
    %v152 = vpop.f32.mrb[0].mxu0
    %153 = vdwg.mxu0
    %v154 = vld [vmem:[%s4] sm:$0x1]
    %v155 = vld [vmem:[%s4 + $0x1] sm:$0x1]
    %v156 = vrot.slane %v151, 4
    %v157 = vadd.f32 %v151, %v156
    %v158 = vrot.slane %v157, 2
    %v159 = vadd.f32 %v157, %v158
    %v160 = vrot.slane %v159, 1
    %v161 = vadd.f32 %v159, %v160
    %v162 = vmul.f32 %v161, 0.125
    %v163 = vmul.f32 %v151, %v151
    %v164 = vrot.slane %v163, 4
    %v165 = vadd.f32 %v163, %v164
    %v166 = vrot.slane %v165, 2
    %v167 = vadd.f32 %v165, %v166
    %v168 = vrot.slane %v167, 1
    %v169 = vadd.f32 %v167, %v168
    %v170 = vmul.f32 %v169, 0.125
    %v171 = vmul.f32 %v162, %v162
    %v172 = vsub.f32 %v170, %v171
    %v173 = vmax.f32 %v172, 0.0
    %v174 = vadd.f32 %v173, 1e-05
    %v175 = vrsqrt.pop %v174
    %v176 = vmul.f32 %v154, %v175
    %v177 = vmul.f32 %v162, %v176
    %v178 = vsub.f32 %v155, %v177
    %v179 = vlaneseq
    %v180 = vshrl.u32 %v179, 7
    %v181 = vsub.s32 0, %v180
    %v182 = vrot.slane %v176, %v181
    %v183 = vmul.f32 %v151, %v182
    %v184 = vlaneseq
    %v185 = vshrl.u32 %v184, 7
    %v186 = vsub.s32 0, %v185
    %v187 = vrot.slane %v178, %v186
    %v188 = vadd.f32 %v183, %v187
    %v189 = vmax.f32 %v188, 0.0
    %v190 = vld [vmem:[#allocation5 + $0x10] sm:$0xff]
    %v191 = vld [vmem:[#allocation5 + $0x18] sm:$0xff]
    %v192 = vld [vmem:[#allocation5 + $0x20] sm:$0xff]
    %v193 = vld [vmem:[#allocation5 + $0x28] sm:$0xff]
    %v194 = vld [vmem:[#allocation5 + $0x30] sm:$0xff]
    %v195 = vld [vmem:[#allocation5 + $0x38] sm:$0xff]
    %v196 = vld [vmem:[#allocation5 + $0x40] sm:$0xff]
    %v197 = vld [vmem:[#allocation5 + $0x48] sm:$0xff]
    %v198 = vld [vmem:[#allocation5 + $0x50] sm:$0xff]
    %v199 = vld [vmem:[#allocation5 + $0x58] sm:$0xff]
    %v200 = vld [vmem:[#allocation5 + $0x60] sm:$0xff]
    %v201 = vld [vmem:[#allocation5 + $0x68] sm:$0xff]
    %v202 = vld [vmem:[#allocation5 + $0x70] sm:$0xff]
    %v203 = vld [vmem:[#allocation5 + $0x78] sm:$0xff]
    %v204 = vld [vmem:[#allocation5 + $0x80] sm:$0xff]
    %v205 = vld [vmem:[#allocation5 + $0x88] sm:$0xff]
    %206 = vmatprep.subr.mxu0 0.0
    %207 = vmatpush1.msra.mxu0 %v190
    %208 = vmatprep.subr.mxu0 0.0
    %209 = vmatpush1.msra.mxu0 %v191
    %210 = vmatprep.subr.mxu0 0.0
    %211 = vmatpush1.msra.mxu0 %v192
    %212 = vmatprep.subr.mxu0 0.0
    %213 = vmatpush1.msra.mxu0 %v193
    %214 = vmatprep.subr.mxu0 0.0
    %215 = vmatpush1.msra.mxu0 %v194
    %216 = vmatprep.subr.mxu0 0.0
    %217 = vmatpush1.msra.mxu0 %v195
    %218 = vmatprep.subr.mxu0 0.0
    %219 = vmatpush1.msra.mxu0 %v196
    %220 = vmatprep.subr.mxu0 0.0
    %221 = vmatpush1.msra.mxu0 %v197
    %222 = vmatprep.subr.mxu0 0.0
    %223 = vmatpush1.msra.mxu0 %v198
    %224 = vmatprep.subr.mxu0 0.0
    %225 = vmatpush1.msra.mxu0 %v199
    %226 = vmatprep.subr.mxu0 0.0
    %227 = vmatpush1.msra.mxu0 %v200
    %228 = vmatprep.subr.mxu0 0.0
    %229 = vmatpush1.msra.mxu0 %v201
    %230 = vmatprep.subr.mxu0 0.0
    %231 = vmatpush1.msra.mxu0 %v202
    %232 = vmatprep.subr.mxu0 0.0
    %233 = vmatpush1.msra.mxu0 %v203
    %234 = vmatprep.subr.mxu0 0.0
    %235 = vmatpush1.msra.mxu0 %v204
    %236 = vmatprep.subr.mxu0 0.0
    %237 = vmatpush1.msra.mxu0 %v205
    %238 = vmatprep.subr.mxu0 0.0
    %239 = vmatpush1.msra.mxu0 0.0
    %240 = vmatprep.subr.mxu0 0.0
    %241 = vmatpush1.msra.mxu0 0.0
    %242 = vmatprep.subr.mxu0 0.0
    %243 = vmatpush1.msra.mxu0 0.0
    %244 = vmatprep.subr.mxu0 0.0
    %245 = vmatpush1.msra.mxu0 0.0
    %246 = vmatprep.subr.mxu0 0.0
    %247 = vmatpush1.msra.mxu0 0.0
    %248 = vmatprep.subr.mxu0 0.0
    %249 = vmatpush1.msra.mxu0 0.0
    %250 = vmatprep.subr.mxu0 0.0
    %251 = vmatpush1.msra.mxu0 0.0
    %252 = vmatprep.subr.mxu0 0.0
    %253 = vmatpush1.msra.mxu0 0.0
    %254 = vmatprep.subr.mxu0 0.0
    %255 = vmatpush1.msra.mxu0 0.0
    %256 = vmatprep.subr.mxu0 0.0
    %257 = vmatpush1.msra.mxu0 0.0
    %258 = vmatprep.subr.mxu0 0.0
    %259 = vmatpush1.msra.mxu0 0.0
    %260 = vmatprep.subr.mxu0 0.0
    %261 = vmatpush1.msra.mxu0 0.0
    %262 = vmatprep.subr.mxu0 0.0
    %263 = vmatpush1.msra.mxu0 0.0
    %264 = vmatprep.subr.mxu0 0.0
    %265 = vmatpush1.msra.mxu0 0.0
    %266 = vmatprep.subr.mxu0 0.0
    %267 = vmatpush1.msra.mxu0 0.0
    %268 = vmatprep.subr.mxu0 0.0
    %269 = vmatpush1.msra.mxu0 0.0
    %270 = vmatprep.mubr.f32.mxu0 0.0
    %271 = vmatmul.mubr.f32.gmra.mrb[0].mxu0 %v189
    %v272 = vpop.f32.mrb[0].mxu0
    %v273 = vadd.f32 0.0, %v272
    %v274 = vpop.f32.mrb[0].mxu0
    %275 = vdwg.mxu0
    %v276 = vld [vmem:[%s4 + $0x2] sm:$0x1]
    %v277 = vld [vmem:[%s4 + $0x3] sm:$0x1]
    %v278 = vrot.slane %v273, 4
    %v279 = vadd.f32 %v273, %v278
    %v280 = vrot.slane %v279, 2
    %v281 = vadd.f32 %v279, %v280
    %v282 = vrot.slane %v281, 1
    %v283 = vadd.f32 %v281, %v282
    %v284 = vmul.f32 %v283, 0.125
    %v285 = vmul.f32 %v273, %v273
    %v286 = vrot.slane %v285, 4
    %v287 = vadd.f32 %v285, %v286
    %v288 = vrot.slane %v287, 2
    %v289 = vadd.f32 %v287, %v288
    %v290 = vrot.slane %v289, 1
    %v291 = vadd.f32 %v289, %v290
    %v292 = vmul.f32 %v291, 0.125
    %v293 = vmul.f32 %v284, %v284
    %v294 = vsub.f32 %v292, %v293
    %v295 = vmax.f32 %v294, 0.0
    %v296 = vadd.f32 %v295, 1e-05
    %v297 = vrsqrt.pop %v296
    %v298 = vmul.f32 %v276, %v297
    %v299 = vmul.f32 %v284, %v298
    %v300 = vsub.f32 %v277, %v299
    %v301 = vlaneseq
    %v302 = vshrl.u32 %v301, 7
    %v303 = vsub.s32 0, %v302
    %v304 = vrot.slane %v298, %v303
    %v305 = vmul.f32 %v273, %v304
    %v306 = vlaneseq
    %v307 = vshrl.u32 %v306, 7
    %v308 = vsub.s32 0, %v307
    %v309 = vrot.slane %v300, %v308
    %v310 = vadd.f32 %v305, %v309
    %v311 = vmax.f32 %v310, 0.0
    %v312 = vld [vmem:[#allocation5 + $0x90] sm:$0xff]
    %v313 = vld [vmem:[#allocation5 + $0x98] sm:$0xff]
    %v314 = vld [vmem:[#allocation5 + $0xa0] sm:$0xff]
    %v315 = vld [vmem:[#allocation5 + $0xa8] sm:$0xff]
    %v316 = vld [vmem:[#allocation5 + $0xb0] sm:$0xff]
    %v317 = vld [vmem:[#allocation5 + $0xb8] sm:$0xff]
    %v318 = vld [vmem:[#allocation5 + $0xc0] sm:$0xff]
    %v319 = vld [vmem:[#allocation5 + $0xc8] sm:$0xff]
    %v320 = vld [vmem:[#allocation5 + $0xd0] sm:$0xff]
    %v321 = vld [vmem:[#allocation5 + $0xd8] sm:$0xff]
    %v322 = vld [vmem:[#allocation5 + $0xe0] sm:$0xff]
    %v323 = vld [vmem:[#allocation5 + $0xe8] sm:$0xff]
    %v324 = vld [vmem:[#allocation5 + $0xf0] sm:$0xff]
    %v325 = vld [vmem:[#allocation5 + $0xf8] sm:$0xff]
    %v326 = vld [vmem:[#allocation5 + $0x100] sm:$0xff]
    %v327 = vld [vmem:[#allocation5 + $0x108] sm:$0xff]
    %328 = vmatprep.subr.mxu0 0.0
    %329 = vmatpush1.msra.mxu0 %v312
    %330 = vmatprep.subr.mxu0 0.0
    %331 = vmatpush1.msra.mxu0 %v313
    %332 = vmatprep.subr.mxu0 0.0
    %333 = vmatpush1.msra.mxu0 %v314
    %334 = vmatprep.subr.mxu0 0.0
    %335 = vmatpush1.msra.mxu0 %v315
    %336 = vmatprep.subr.mxu0 0.0
    %337 = vmatpush1.msra.mxu0 %v316
    %338 = vmatprep.subr.mxu0 0.0
    %339 = vmatpush1.msra.mxu0 %v317
    %340 = vmatprep.subr.mxu0 0.0
    %341 = vmatpush1.msra.mxu0 %v318
    %342 = vmatprep.subr.mxu0 0.0
    %343 = vmatpush1.msra.mxu0 %v319
    %344 = vmatprep.subr.mxu0 0.0
    %345 = vmatpush1.msra.mxu0 %v320
    %346 = vmatprep.subr.mxu0 0.0
    %347 = vmatpush1.msra.mxu0 %v321
    %348 = vmatprep.subr.mxu0 0.0
    %349 = vmatpush1.msra.mxu0 %v322
    %350 = vmatprep.subr.mxu0 0.0
    %351 = vmatpush1.msra.mxu0 %v323
    %352 = vmatprep.subr.mxu0 0.0
    %353 = vmatpush1.msra.mxu0 %v324
    %354 = vmatprep.subr.mxu0 0.0
    %355 = vmatpush1.msra.mxu0 %v325
    %356 = vmatprep.subr.mxu0 0.0
    %357 = vmatpush1.msra.mxu0 %v326
    %358 = vmatprep.subr.mxu0 0.0
    %359 = vmatpush1.msra.mxu0 %v327
    %360 = vmatprep.subr.mxu0 0.0
    %361 = vmatpush1.msra.mxu0 0.0
    %362 = vmatprep.subr.mxu0 0.0
    %363 = vmatpush1.msra.mxu0 0.0
    %364 = vmatprep.subr.mxu0 0.0
    %365 = vmatpush1.msra.mxu0 0.0
    %366 = vmatprep.subr.mxu0 0.0
    %367 = vmatpush1.msra.mxu0 0.0
    %368 = vmatprep.subr.mxu0 0.0
    %369 = vmatpush1.msra.mxu0 0.0
    %370 = vmatprep.subr.mxu0 0.0
    %371 = vmatpush1.msra.mxu0 0.0
    %372 = vmatprep.subr.mxu0 0.0
    %373 = vmatpush1.msra.mxu0 0.0
    %374 = vmatprep.subr.mxu0 0.0
    %375 = vmatpush1.msra.mxu0 0.0
    %376 = vmatprep.subr.mxu0 0.0
    %377 = vmatpush1.msra.mxu0 0.0
    %378 = vmatprep.subr.mxu0 0.0
    %379 = vmatpush1.msra.mxu0 0.0
    %380 = vmatprep.subr.mxu0 0.0
    %381 = vmatpush1.msra.mxu0 0.0
    %382 = vmatprep.subr.mxu0 0.0
    %383 = vmatpush1.msra.mxu0 0.0
    %384 = vmatprep.subr.mxu0 0.0
    %385 = vmatpush1.msra.mxu0 0.0
    %386 = vmatprep.subr.mxu0 0.0
    %387 = vmatpush1.msra.mxu0 0.0
    %388 = vmatprep.subr.mxu0 0.0
    %389 = vmatpush1.msra.mxu0 0.0
    %390 = vmatprep.subr.mxu0 0.0
    %391 = vmatpush1.msra.mxu0 0.0
    %392 = vmatprep.mubr.f32.mxu0 0.0
    %393 = vmatmul.mubr.f32.gmra.mrb[0].mxu0 %v311
    %v394 = vpop.f32.mrb[0].mxu0
    %v395 = vadd.f32 0.0, %v394
    %v396 = vpop.f32.mrb[0].mxu0
    %397 = vdwg.mxu0
    %v398 = vld [vmem:[%s4 + $0x4] sm:$0x1]
    %v399 = vld [vmem:[%s4 + $0x5] sm:$0x1]
    %v400 = vrot.slane %v395, 4
    %v401 = vadd.f32 %v395, %v400
    %v402 = vrot.slane %v401, 2
    %v403 = vadd.f32 %v401, %v402
    %v404 = vrot.slane %v403, 1
    %v405 = vadd.f32 %v403, %v404
    %v406 = vmul.f32 %v405, 0.125
    %v407 = vmul.f32 %v395, %v395
    %v408 = vrot.slane %v407, 4
    %v409 = vadd.f32 %v407, %v408
    %v410 = vrot.slane %v409, 2
    %v411 = vadd.f32 %v409, %v410
    %v412 = vrot.slane %v411, 1
    %v413 = vadd.f32 %v411, %v412
    %v414 = vmul.f32 %v413, 0.125
    %v415 = vmul.f32 %v406, %v406
    %v416 = vsub.f32 %v414, %v415
    %v417 = vmax.f32 %v416, 0.0
    %v418 = vadd.f32 %v417, 1e-05
    %v419 = vrsqrt.pop %v418
    %v420 = vmul.f32 %v398, %v419
    %v421 = vmul.f32 %v406, %v420
    %v422 = vsub.f32 %v399, %v421
    %v423 = vlaneseq
    %v424 = vshrl.u32 %v423, 7
    %v425 = vsub.s32 0, %v424
    %v426 = vrot.slane %v420, %v425
    %v427 = vmul.f32 %v395, %v426
    %v428 = vlaneseq
    %v429 = vshrl.u32 %v428, 7
    %v430 = vsub.s32 0, %v429
    %v431 = vrot.slane %v422, %v430
    %v432 = vadd.f32 %v427, %v431
    %v433 = vmax.f32 %v432, 0.0
    %v434 = vld [vmem:[#allocation7] sm:$0xff]
    %v435 = vld [vmem:[#allocation7 + $0x8] sm:$0xff]
    %v436 = vld [vmem:[#allocation7 + $0x10] sm:$0xff]
    %v437 = vld [vmem:[#allocation7 + $0x18] sm:$0xff]
    %v438 = vld [vmem:[#allocation7 + $0x20] sm:$0xff]
    %v439 = vld [vmem:[#allocation7 + $0x28] sm:$0xff]
    %v440 = vld [vmem:[#allocation7 + $0x30] sm:$0xff]
    %v441 = vld [vmem:[#allocation7 + $0x38] sm:$0xff]
    %v442 = vld [vmem:[#allocation7 + $0x40] sm:$0xff]
    %v443 = vld [vmem:[#allocation7 + $0x48] sm:$0xff]
    %v444 = vld [vmem:[#allocation7 + $0x50] sm:$0xff]
    %v445 = vld [vmem:[#allocation7 + $0x58] sm:$0xff]
    %v446 = vld [vmem:[#allocation7 + $0x60] sm:$0xff]
    %v447 = vld [vmem:[#allocation7 + $0x68] sm:$0xff]
    %v448 = vld [vmem:[#allocation7 + $0x70] sm:$0xff]
    %v449 = vld [vmem:[#allocation7 + $0x78] sm:$0xff]
    %v450 = vld [vmem:[#allocation7 + $0x80] sm:$0xff]
    %v451 = vld [vmem:[#allocation7 + $0x88] sm:$0xff]
    %v452 = vld [vmem:[#allocation7 + $0x90] sm:$0xff]
    %v453 = vld [vmem:[#allocation7 + $0x98] sm:$0xff]
    %v454 = vld [vmem:[#allocation7 + $0xa0] sm:$0xff]
    %v455 = vld [vmem:[#allocation7 + $0xa8] sm:$0xff]
    %v456 = vld [vmem:[#allocation7 + $0xb0] sm:$0xff]
    %v457 = vld [vmem:[#allocation7 + $0xb8] sm:$0xff]
    %v458 = vld [vmem:[#allocation7 + $0xc0] sm:$0xff]
    %v459 = vld [vmem:[#allocation7 + $0xc8] sm:$0xff]
    %v460 = vld [vmem:[#allocation7 + $0xd0] sm:$0xff]
    %v461 = vld [vmem:[#allocation7 + $0xd8] sm:$0xff]
    %v462 = vld [vmem:[#allocation7 + $0xe0] sm:$0xff]
    %v463 = vld [vmem:[#allocation7 + $0xe8] sm:$0xff]
    %v464 = vld [vmem:[#allocation7 + $0xf0] sm:$0xff]
    %v465 = vld [vmem:[#allocation7 + $0xf8] sm:$0xff]
    %466 = vmatprep.subr.mxu0 %v435
    %467 = vmatpush1.msra.mxu0 %v434
    %468 = vmatprep.subr.mxu0 %v437
    %469 = vmatpush1.msra.mxu0 %v436
    %470 = vmatprep.subr.mxu0 %v439
    %471 = vmatpush1.msra.mxu0 %v438
    %472 = vmatprep.subr.mxu0 %v441
    %473 = vmatpush1.msra.mxu0 %v440
    %474 = vmatprep.subr.mxu0 %v443
    %475 = vmatpush1.msra.mxu0 %v442
    %476 = vmatprep.subr.mxu0 %v445
    %477 = vmatpush1.msra.mxu0 %v444
    %478 = vmatprep.subr.mxu0 %v447
    %479 = vmatpush1.msra.mxu0 %v446
    %480 = vmatprep.subr.mxu0 %v449
    %481 = vmatpush1.msra.mxu0 %v448
    %482 = vmatprep.subr.mxu0 %v451
    %483 = vmatpush1.msra.mxu0 %v450
    %484 = vmatprep.subr.mxu0 %v453
    %485 = vmatpush1.msra.mxu0 %v452
    %486 = vmatprep.subr.mxu0 %v455
    %487 = vmatpush1.msra.mxu0 %v454
    %488 = vmatprep.subr.mxu0 %v457
    %489 = vmatpush1.msra.mxu0 %v456
    %490 = vmatprep.subr.mxu0 %v459
    %491 = vmatpush1.msra.mxu0 %v458
    %492 = vmatprep.subr.mxu0 %v461
    %493 = vmatpush1.msra.mxu0 %v460
    %494 = vmatprep.subr.mxu0 %v463
    %495 = vmatpush1.msra.mxu0 %v462
    %496 = vmatprep.subr.mxu0 %v465
    %497 = vmatpush1.msra.mxu0 %v464
    %498 = vmatprep.subr.mxu0 0.0
    %499 = vmatpush1.msra.mxu0 0.0
    %500 = vmatprep.subr.mxu0 0.0
    %501 = vmatpush1.msra.mxu0 0.0
    %502 = vmatprep.subr.mxu0 0.0
    %503 = vmatpush1.msra.mxu0 0.0
    %504 = vmatprep.subr.mxu0 0.0
    %505 = vmatpush1.msra.mxu0 0.0
    %506 = vmatprep.subr.mxu0 0.0
    %507 = vmatpush1.msra.mxu0 0.0
    %508 = vmatprep.subr.mxu0 0.0
    %509 = vmatpush1.msra.mxu0 0.0
    %510 = vmatprep.subr.mxu0 0.0
    %511 = vmatpush1.msra.mxu0 0.0
    %512 = vmatprep.subr.mxu0 0.0
    %513 = vmatpush1.msra.mxu0 0.0
    %514 = vmatprep.subr.mxu0 0.0
    %515 = vmatpush1.msra.mxu0 0.0
    %516 = vmatprep.subr.mxu0 0.0
    %517 = vmatpush1.msra.mxu0 0.0
    %518 = vmatprep.subr.mxu0 0.0
    %519 = vmatpush1.msra.mxu0 0.0
    %520 = vmatprep.subr.mxu0 0.0
    %521 = vmatpush1.msra.mxu0 0.0
    %522 = vmatprep.subr.mxu0 0.0
    %523 = vmatpush1.msra.mxu0 0.0
    %524 = vmatprep.subr.mxu0 0.0
    %525 = vmatpush1.msra.mxu0 0.0
    %526 = vmatprep.subr.mxu0 0.0
    %527 = vmatpush1.msra.mxu0 0.0
    %528 = vmatprep.subr.mxu0 0.0
    %529 = vmatpush1.msra.mxu0 0.0
    %530 = vmatprep.mubr.f32.mxu0 0.0
    %531 = vmatmul.mubr.f32.gmra.mrb[0].mxu0 %v433
    %v532 = vpop.f32.mrb[0].mxu0
    %v533 = vadd.f32 0.0, %v532
    %v534 = vpop.f32.mrb[0].mxu0
    %v535 = vadd.f32 0.0, %v534
    %536 = vdwg.mxu0
    %v537 = vld [vmem:[%s5] ss:$2 sm:$0x3]
    %s538 = scalar_lea.vmem %s5, 1
    %v539 = vld [vmem:[%s538] ss:$2 sm:$0x3]
    %v540 = vrot.slane %v533, 4
    %v541 = vadd.f32 %v533, %v540
    %v542 = vrot.slane %v541, 2
    %v543 = vadd.f32 %v541, %v542
    %v544 = vrot.slane %v543, 1
    %v545 = vadd.f32 %v543, %v544
    %v546 = vrot.slane %v535, 4
    %v547 = vadd.f32 %v535, %v546
    %v548 = vrot.slane %v547, 2
    %v549 = vadd.f32 %v547, %v548
    %v550 = vrot.slane %v549, 1
    %v551 = vadd.f32 %v549, %v550
    %v552 = vmul.f32 %v545, 0.125
    %v553 = vmul.f32 %v551, 0.125
    %v554 = vmul.f32 %v533, %v533
    %v555 = vmul.f32 %v535, %v535
    %v556 = vrot.slane %v554, 4
    %v557 = vadd.f32 %v554, %v556
    %v558 = vrot.slane %v557, 2
    %v559 = vadd.f32 %v557, %v558
    %v560 = vrot.slane %v559, 1
    %v561 = vadd.f32 %v559, %v560
    %v562 = vrot.slane %v555, 4
    %v563 = vadd.f32 %v555, %v562
    %v564 = vrot.slane %v563, 2
    %v565 = vadd.f32 %v563, %v564
    %v566 = vrot.slane %v565, 1
    %v567 = vadd.f32 %v565, %v566
    %v568 = vmul.f32 %v561, 0.125
    %v569 = vmul.f32 %v567, 0.125
    %v570 = vmul.f32 %v552, %v552
    %v571 = vmul.f32 %v553, %v553
    %v572 = vsub.f32 %v568, %v570
    %v573 = vsub.f32 %v569, %v571
    %v574 = vmax.f32 %v572, 0.0
    %v575 = vmax.f32 %v573, 0.0
    %v576 = vadd.f32 %v574, 1e-05
    %v577 = vadd.f32 %v575, 1e-05
    %v578 = vrsqrt.pop %v576
    %v579 = vrsqrt.pop %v577
    %v582 = vcombine.low %v578, %v579
    %v584 = vunpack.c.l.s4 1966171168
    %v585 = vunpack.c.0.s8 %v584
    %v586 = vlaneseq
    %v587 = vshrl.u32 %v586, 7
    %v588 = vsub.s32 %v585, %v587
    %v589 = vrot.slane %v582, %v588
    %v591 = vunpack.c.l.s4 1966171168
    %v592 = vunpack.c.0.s8 %v591
    %v593 = vlaneseq
    %v594 = vshrl.u32 %v593, 7
    %v595 = vsub.s32 %v592, %v594
    %v596 = vrot.slane %v589, %v595
    %v598 = vmul.f32 %v537, %v596
    %v600 = vlaneseq
    %v601 = vshrl.u32 %v600, 7
    %v602 = vsub.s32 0, %v601
    %v603 = vrot.slane %v598, %v602
    %v604 = vlaneseq
    %v605 = vshrl.u32 %v604, 7
    %v606 = vsub.s32 1, %v605
    %v607 = vrot.slane %v598, %v606
    %v610 = vmul.f32 %v552, %v603
    %v611 = vmul.f32 %v553, %v607
    %v614 = vcombine.low %v610, %v611
    %v616 = vunpack.c.l.s4 1966171168
    %v617 = vunpack.c.0.s8 %v616
    %v618 = vlaneseq
    %v619 = vshrl.u32 %v618, 7
    %v620 = vsub.s32 %v617, %v619
    %v621 = vrot.slane %v614, %v620
    %v623 = vunpack.c.l.s4 1966171168
    %v624 = vunpack.c.0.s8 %v623
    %v625 = vlaneseq
    %v626 = vshrl.u32 %v625, 7
    %v627 = vsub.s32 %v624, %v626
    %v628 = vrot.slane %v621, %v627
    %v630 = vsub.f32 %v539, %v628
    %v631 = vmul.f32 %v533, %v603
    %v632 = vmul.f32 %v535, %v607
    %v634 = vlaneseq
    %v635 = vshrl.u32 %v634, 7
    %v636 = vsub.s32 0, %v635
    %v637 = vrot.slane %v630, %v636
    %v638 = vlaneseq
    %v639 = vshrl.u32 %v638, 7
    %v640 = vsub.s32 1, %v639
    %v641 = vrot.slane %v630, %v640
    %v644 = vadd.f32 %v631, %v637
    %v645 = vadd.f32 %v632, %v641
    %v646 = vmax.f32 %v644, 0.0
    %v647 = vmax.f32 %v645, 0.0
    %v648 = vld [vmem:[#allocation8] sm:$0xff]
    %v649 = vld [vmem:[#allocation8 + $0x8] sm:$0xff]
    %v650 = vld [vmem:[#allocation8 + $0x10] sm:$0xff]
    %v651 = vld [vmem:[#allocation8 + $0x18] sm:$0xff]
    %v652 = vld [vmem:[#allocation8 + $0x20] sm:$0xff]
    %v653 = vld [vmem:[#allocation8 + $0x28] sm:$0xff]
    %v654 = vld [vmem:[#allocation8 + $0x30] sm:$0xff]
    %v655 = vld [vmem:[#allocation8 + $0x38] sm:$0xff]
    %v656 = vld [vmem:[#allocation8 + $0x40] sm:$0xff]
    %v657 = vld [vmem:[#allocation8 + $0x48] sm:$0xff]
    %v658 = vld [vmem:[#allocation8 + $0x50] sm:$0xff]
    %v659 = vld [vmem:[#allocation8 + $0x58] sm:$0xff]
    %v660 = vld [vmem:[#allocation8 + $0x60] sm:$0xff]
    %v661 = vld [vmem:[#allocation8 + $0x68] sm:$0xff]
    %v662 = vld [vmem:[#allocation8 + $0x70] sm:$0xff]
    %v663 = vld [vmem:[#allocation8 + $0x78] sm:$0xff]
    %v664 = vld [vmem:[#allocation8 + $0x80] sm:$0xff]
    %v665 = vld [vmem:[#allocation8 + $0x88] sm:$0xff]
    %v666 = vld [vmem:[#allocation8 + $0x90] sm:$0xff]
    %v667 = vld [vmem:[#allocation8 + $0x98] sm:$0xff]
    %v668 = vld [vmem:[#allocation8 + $0xa0] sm:$0xff]
    %v669 = vld [vmem:[#allocation8 + $0xa8] sm:$0xff]
    %v670 = vld [vmem:[#allocation8 + $0xb0] sm:$0xff]
    %v671 = vld [vmem:[#allocation8 + $0xb8] sm:$0xff]
    %v672 = vld [vmem:[#allocation8 + $0xc0] sm:$0xff]
    %v673 = vld [vmem:[#allocation8 + $0xc8] sm:$0xff]
    %v674 = vld [vmem:[#allocation8 + $0xd0] sm:$0xff]
    %v675 = vld [vmem:[#allocation8 + $0xd8] sm:$0xff]
    %v676 = vld [vmem:[#allocation8 + $0xe0] sm:$0xff]
    %v677 = vld [vmem:[#allocation8 + $0xe8] sm:$0xff]
    %v678 = vld [vmem:[#allocation8 + $0xf0] sm:$0xff]
    %v679 = vld [vmem:[#allocation8 + $0xf8] sm:$0xff]
    %v680 = vld [vmem:[%s4 + $0x6] sm:$0x1]
    %v681 = vlaneseq
    %v682 = vshrl.u32 %v681, 7
    %v683 = vsub.s32 0, %v682
    %v684 = vrot.slane %v680, %v683
    %685 = vmatprep.subr.mxu0 0.0
    %686 = vmatpush1.msra.mxu0 %v648
    %687 = vmatprep.subr.mxu0 0.0
    %688 = vmatpush1.msra.mxu0 %v649
    %689 = vmatprep.subr.mxu0 0.0
    %690 = vmatpush1.msra.mxu0 %v650
    %691 = vmatprep.subr.mxu0 0.0
    %692 = vmatpush1.msra.mxu0 %v651
    %693 = vmatprep.subr.mxu0 0.0
    %694 = vmatpush1.msra.mxu0 %v652
    %695 = vmatprep.subr.mxu0 0.0
    %696 = vmatpush1.msra.mxu0 %v653
    %697 = vmatprep.subr.mxu0 0.0
    %698 = vmatpush1.msra.mxu0 %v654
    %699 = vmatprep.subr.mxu0 0.0
    %700 = vmatpush1.msra.mxu0 %v655
    %701 = vmatprep.subr.mxu0 0.0
    %702 = vmatpush1.msra.mxu0 %v656
    %703 = vmatprep.subr.mxu0 0.0
    %704 = vmatpush1.msra.mxu0 %v657
    %705 = vmatprep.subr.mxu0 0.0
    %706 = vmatpush1.msra.mxu0 %v658
    %707 = vmatprep.subr.mxu0 0.0
    %708 = vmatpush1.msra.mxu0 %v659
    %709 = vmatprep.subr.mxu0 0.0
    %710 = vmatpush1.msra.mxu0 %v660
    %711 = vmatprep.subr.mxu0 0.0
    %712 = vmatpush1.msra.mxu0 %v661
    %713 = vmatprep.subr.mxu0 0.0
    %714 = vmatpush1.msra.mxu0 %v662
    %715 = vmatprep.subr.mxu0 0.0
    %716 = vmatpush1.msra.mxu0 %v663
    %717 = vmatprep.subr.mxu0 0.0
    %718 = vmatpush1.msra.mxu0 %v664
    %719 = vmatprep.subr.mxu0 0.0
    %720 = vmatpush1.msra.mxu0 %v665
    %721 = vmatprep.subr.mxu0 0.0
    %722 = vmatpush1.msra.mxu0 %v666
    %723 = vmatprep.subr.mxu0 0.0
    %724 = vmatpush1.msra.mxu0 %v667
    %725 = vmatprep.subr.mxu0 0.0
    %726 = vmatpush1.msra.mxu0 %v668
    %727 = vmatprep.subr.mxu0 0.0
    %728 = vmatpush1.msra.mxu0 %v669
    %729 = vmatprep.subr.mxu0 0.0
    %730 = vmatpush1.msra.mxu0 %v670
    %731 = vmatprep.subr.mxu0 0.0
    %732 = vmatpush1.msra.mxu0 %v671
    %733 = vmatprep.subr.mxu0 0.0
    %734 = vmatpush1.msra.mxu0 %v672
    %735 = vmatprep.subr.mxu0 0.0
    %736 = vmatpush1.msra.mxu0 %v673
    %737 = vmatprep.subr.mxu0 0.0
    %738 = vmatpush1.msra.mxu0 %v674
    %739 = vmatprep.subr.mxu0 0.0
    %740 = vmatpush1.msra.mxu0 %v675
    %741 = vmatprep.subr.mxu0 0.0
    %742 = vmatpush1.msra.mxu0 %v676
    %743 = vmatprep.subr.mxu0 0.0
    %744 = vmatpush1.msra.mxu0 %v677
    %745 = vmatprep.subr.mxu0 0.0
    %746 = vmatpush1.msra.mxu0 %v678
    %747 = vmatprep.subr.mxu0 0.0
    %748 = vmatpush1.msra.mxu0 %v679
    %749 = vmatprep.mubr.f32.mxu0 %v647
    %750 = vmatmul.mubr.f32.gmra.mrb[0].mxu0 %v646
    %v751 = vpop.f32.mrb[0].mxu0
    %v752 = vadd.f32 %v684, %v751
    %v753 = vpop.f32.mrb[0].mxu0
    %754 = vdwg.mxu0
    %756 = vrot.lane.b32.xlu0 %v752, 123
    %v757 = vpop.permute.xlu0 %756
    %vm759 = vcmask 7168
    %v760 = vsel %vm759, %v757, 0.0
    %761 = vadd.xlane.f32.xlu0 %v760
    %v762 = vpop.xlane.xlu0 %761
    %v763 = vrot.slane %v762, 4
    %v764 = vadd.f32 %v762, %v763
    %v765 = vrot.slane %v764, 2
    %v766 = vadd.f32 %v764, %v765
    %v767 = vrot.slane %v766, 1
    %v768 = vadd.f32 %v766, %v767
    %s769 = vtos %v768
    %s770 = smul.f32 %s769, 0.125
    %771 = vset.pattern.permute.xlu0 4
    %772 = vperm.xlu0 %771, %v752
    %v773 = vpop.permute.xlu0 %772
    %v775 = vadd.f32 %v773, %v752
    %v776 = vstv %s770
    %v777 = vsub.f32 %v775, %v776
    %778 = vst [vmem:[#allocation10] sm:$0xff] %v777
    // Predicated region
    $region42: #{tpu_custom_call.1} parent=1 // pred_check
      _
    $region43: #{tpu_custom_call.1} parent=1 // pred_check_branch
      %780 = sbr.rel (0) target = $region45
    $region44: #{tpu_custom_call.1} parent=1 // pred_region
      %s782 = ssub.s32 128, 128
      %783 = vsyncadd [#allocation4], %s782
      %s785 = sshll.u32 [#allocation10], 4
      %s786 = int_to_ptr.vmem [resolvable:$true] %s785
      %788 = dma.vmem_to_hbm [thread:$0]  %s786, 128, %s6, [#allocation4]
    $region45: #{tpu_custom_call.1} parent=1 // pred_fallthru
      _
    // Predicated region
    $region46: #{tpu_custom_call.1} parent=1 // pred_check
      _
    $region47: #{tpu_custom_call.1} parent=1 // pred_check_branch
      %790 = sbr.rel (0) target = $region49
    $region48: #{tpu_custom_call.1} parent=1 // pred_region
      %791 = dma.done [#allocation4], 128
    $region49: #{tpu_custom_call.1} parent=1 // pred_fallthru
      _
    %792 = vsyncpa [#allocation3], 1
    %793 = vsyncpa [#allocation6], 1
    %794 = vsyncpa [#allocation9], 1
    %795 = vsyncpa [#allocation4], 1

</llo_original>
